<compile_context>
chip_gen: v6e
topology: v6e:2x2x1
jax: 0.10.0
libtpu: 0.0.40
codegen_flags: <defaults>
</compile_context>

<pallas_src>
import math

import jax
import jax.numpy as jnp
from jax.experimental import pallas as pl
from jax.experimental.pallas import tpu as pltpu


def _add_kernel(x_ref, pe_ref, out_ref):
    # Works for both layouts:
    #   flattened: x_ref (B, tile_f),  pe_ref (1, tile_f)  -> broadcast over batch
    #   3-D:       x_ref (tile_s, D),  pe_ref (tile_s, D)
    out_ref[...] = x_ref[...] + pe_ref[...]


def build_sinusoidal_pe(max_len, d_model, dtype=jnp.float32):
    """Replicates the buffer built in old_PositionalEncoding_Circular.__init__."""
    position = jnp.arange(max_len, dtype=jnp.float32)[:, None]                  # (L, 1)
    div_term = jnp.exp(
        jnp.arange(0, d_model, 2, dtype=jnp.float32) * (-math.log(10000.0) / d_model)
    )                                                                            # (D//2,)
    angle = position * div_term[None, :] + 2.0 * jnp.pi * position / max_len     # (L, D//2)
    pe = jnp.zeros((max_len, d_model), dtype=jnp.float32)
    pe = pe.at[:, 0::2].set(jnp.sin(angle))
    pe = pe.at[:, 1::2].set(jnp.cos(angle))
    return pe.astype(dtype)


def _round_down(v, m):
    return (v // m) * m


def positional_encoding_forward(
    x,
    pe,
    *,
    vmem_budget_bytes=8 << 20,     # pipeline-buffer budget; fits all TPU generations' defaults
    min_kernel_bytes=256 << 10,    # below this, plain XLA add wins
    force_kernel=False,
):
    """Returns (x + pe[:S], pe[None, :S]) matching the PyTorch forward (eval dropout)."""
    B, S, D = x.shape
    itemsize = jnp.dtype(x.dtype).itemsize
    pe_slice = pe[:S, :].astype(x.dtype)          # (S, D), dtype matched to x
    pe_ret = pe[:S, :][None, :, :]                # second return value (original dtype)

    total_bytes = B * S * D * itemsize
    if total_bytes <= min_kernel_bytes and not force_kernel:
        # Tiny-input fast path: single fused elementwise add.
        return x + pe_slice[None, :, :], pe_ret

    # ----------------- Path 1: lane-dense flattened layout ------------------
    # x:(B,S,D)->(B,F), pe:(S,D)->(1,F) with F=S*D. One block holds the full
    # batch; the add broadcasts pe over batch in-register, so pe is read once.
    F = S * D
    # Double-buffered VMEM per lane column: 2 x-bufs*B + 2 out-bufs*B + 2 pe-bufs*1
    bytes_per_lane = (4 * B + 2) * itemsize
    tile_f_max = vmem_budget_bytes // bytes_per_lane

    if tile_f_max >= F or tile_f_max >= 128:
        x2 = x.reshape(B, F)
        pe2 = pe_slice.reshape(1, F)
        if tile_f_max >= F:
            tile_f, n_tiles = F, 1                       # single block (full dims -> legal)
        else:
            tile_f = _round_down(tile_f_max, 128)        # lane-dense multiple of 128
            n_tiles = pl.cdiv(F, tile_f)                 # partial last block is masked
        out2 = pl.pallas_call(
            _add_kernel,
            out_shape=jax.ShapeDtypeStruct((B, F), x.dtype),
            grid=(n_tiles,),
            in_specs=[
                pl.BlockSpec((B, tile_f), lambda f: (0, f)),     # x
                pl.BlockSpec((1, tile_f), lambda f: (0, f)),     # pe (broadcast over batch)
            ],
            out_specs=pl.BlockSpec((B, tile_f), lambda f: (0, f)),
            compiler_params=pltpu.CompilerParams(
                dimension_semantics=("parallel",)),
        )(x2, pe2)
        return out2.reshape(B, S, D), pe_ret

    # --------------- Path 2: 3-D tiling fallback (very large B) -------------
    # grid=(seq_tiles, B) with batch *innermost* so the pe tile's block index
    # is constant across the inner sweep (reused, not re-DMA'd each step).
    sublane_mult = 8 * max(1, 4 // itemsize)             # 8 f32 / 16 bf16 / 32 int8
    tile_s_max = vmem_budget_bytes // (6 * D * itemsize)
    if tile_s_max >= S:
        tile_s, n_s = S, 1
    else:
        tile_s = max(sublane_mult, _round_down(tile_s_max, sublane_mult))
        n_s = pl.cdiv(S, tile_s)                          # partial last block is masked
    out = pl.pallas_call(
        _add_kernel,
        out_shape=jax.ShapeDtypeStruct((B, S, D), x.dtype),
        grid=(n_s, B),
        in_specs=[
            pl.BlockSpec((pl.Squeezed(), tile_s, D), lambda s, b: (b, s, 0)),  # x
            pl.BlockSpec((tile_s, D), lambda s, b: (s, 0)),                    # pe (batch-shared)
        ],
        out_specs=pl.BlockSpec((pl.Squeezed(), tile_s, D), lambda s, b: (b, s, 0)),
        compiler_params=pltpu.CompilerParams(
            dimension_semantics=("parallel", "arbitrary")),
    )(x, pe_slice)
    return out, pe_ret


def reference_forward(x, pe):
    S = x.shape[1]
    pe_slice = pe[:S, :]
    return x + pe_slice[None, :, :].astype(x.dtype), pe_slice[None, :, :]


if __name__ == "__main__":
    key = jax.random.PRNGKey(0)
    max_len = 10000

    # --- Test 1: module-typical small shape, forced through the flat kernel path ---
    B, S, d_model = 2, 8, 32
    x = jax.random.normal(key, (B, S, d_model), dtype=jnp.float32)
    pe = build_sinusoidal_pe(max_len, d_model)

    out, pe_out = positional_encoding_forward(x, pe, force_kernel=True)
    out = jax.block_until_ready(out)
    pe_out = jax.block_until_ready(pe_out)
    ref_out, ref_pe = reference_forward(x, pe)

    assert out.shape == (B, S, d_model) and out.dtype == jnp.float32
    assert pe_out.shape == (1, S, d_model)
    assert jnp.allclose(out, ref_out, atol=1e-6, rtol=1e-6)
    assert jnp.allclose(pe_out, ref_pe, atol=1e-6, rtol=1e-6)

    # --- Test 2: multi-tile flattened path (d_model < 128 -> lane-dense flatten) ---
    B2, S2, D2 = 2, 64, 48
    x2 = jax.random.normal(jax.random.PRNGKey(0), (B2, S2, D2), dtype=jnp.float32)
    pe2 = build_sinusoidal_pe(max_len, D2)
    out2, pe_out2 = positional_encoding_forward(
        x2, pe2, force_kernel=True, vmem_budget_bytes=16384)   # tiny budget -> several 128-lane tiles
    out2 = jax.block_until_ready(out2)
    ref_out2, ref_pe2 = reference_forward(x2, pe2)
    assert jnp.allclose(out2, ref_out2, atol=1e-6, rtol=1e-6)
    assert jnp.allclose(pe_out2, ref_pe2, atol=1e-6, rtol=1e-6)

    # --- Test 3: 3-D fallback path (budget too small for flat tiles) ---
    out3, pe_out3 = positional_encoding_forward(
        x2, pe2, force_kernel=True, vmem_budget_bytes=4096)    # forces grid=(seq_tiles, B) path
    out3 = jax.block_until_ready(out3)
    assert jnp.allclose(out3, ref_out2, atol=1e-6, rtol=1e-6)
    assert jnp.allclose(pe_out3, ref_pe2, atol=1e-6, rtol=1e-6)

    print("KERNEL_OK")
</pallas_src>

<mosaic_0001>
module attributes {stable_mosaic.version = 11 : i64} {
  func.func @_add_kernel(%arg0: i32, %arg1: memref<2x256xf32, #tpu.memory_space<vmem>>, %arg2: memref<1x256xf32, #tpu.memory_space<vmem>>, %arg3: memref<2x256xf32, #tpu.memory_space<vmem>>) attributes {dimension_semantics = [#tpu.dimension_semantics<parallel>], iteration_bounds = array<i64: 1>, scalar_prefetch = 0 : i64, scratch_operands = 0 : i64, tpu.core_type = #tpu.core_type<tc>, window_params = [{transform_indices = @transform_0, window_bounds = array<i64: 2, 256>}, {transform_indices = @transform_1, window_bounds = array<i64: 1, 256>}, {transform_indices = @transform_2, window_bounds = array<i64: 2, 256>}]} {
    %c0 = arith.constant 0 : index
    %c0_0 = arith.constant 0 : index
    %0 = vector.load %arg1[%c0, %c0_0] : memref<2x256xf32, #tpu.memory_space<vmem>>, vector<2x256xf32>
    %c0_1 = arith.constant 0 : index
    %c0_2 = arith.constant 0 : index
    %1 = vector.load %arg2[%c0_1, %c0_2] : memref<1x256xf32, #tpu.memory_space<vmem>>, vector<1x256xf32>
    %2 = vector.broadcast %1 : vector<1x256xf32> to vector<2x256xf32>
    %3 = arith.addf %0, %2 : vector<2x256xf32>
    %c0_3 = arith.constant 0 : index
    %c0_4 = arith.constant 0 : index
    %4 = vector.load %arg3[%c0_3, %c0_4] : memref<2x256xf32, #tpu.memory_space<vmem>>, vector<2x256xf32>
    tpu.vector_store %arg3[%c0_3, %c0_4], %3 {strides = array<i32>} : memref<2x256xf32, #tpu.memory_space<vmem>>, vector<2x256xf32>,
    return
  }
  func.func @transform_0(%arg0: i32) -> (i32, i32) {
    %c0_i32 = arith.constant 0 : i32
    %c0_i32_0 = arith.constant 0 : i32
    return %c0_i32, %arg0 : i32, i32
  }
  func.func @transform_1(%arg0: i32) -> (i32, i32) {
    %c0_i32 = arith.constant 0 : i32
    %c0_i32_0 = arith.constant 0 : i32
    return %c0_i32, %arg0 : i32, i32
  }
  func.func @transform_2(%arg0: i32) -> (i32, i32) {
    %c0_i32 = arith.constant 0 : i32
    %c0_i32_0 = arith.constant 0 : i32
    return %c0_i32, %arg0 : i32, i32
  }
}

</mosaic_0001>

<llo_original>
// kernel: tpu_custom_call.1
$region0: #{tpu_custom_call.1}
  #allocation0 [shape = 'u32[]', space=smem, size = 0x4, offset = 0x4, fixed_abs, tag = 'smem constant byte address 0x4 - core index']
  #allocation1 [shape = 'u32[144,128]{1,0:T(1,128)}', space=vmem, size = 0x12000, scoped, tag = 'internal scratch']
  %s0 = inlined_call_operand.hbm [shape: f32[2,256], index: 0, kind: input, shape index: {}]
  %s1 = inlined_call_operand.hbm [shape: f32[1,256], index: 1, kind: input, shape index: {}]
  %s2 = inlined_call_operand.hbm [shape: f32[2,256], index: 2, kind: output, shape index: {}]
  %s3 = sld [smem:[#allocation0]]
  $region26: #{tpu_custom_call.1} parent=0
    _
  %s5 = ssub.s32 1, %s3
  %s6 = scalar_select 0, %s5, %s3
  $region1: #{tpu_custom_call.1} parent=0
    #allocation2 [shape = 'u8[2048]{0}', space=vmem, size = 0x800, scoped, tag = 'input window, operand 0, single buffered']
    #allocation3 [shape = 's32[1]{0}', space=sflag, size = 0x4, scoped, tag = 'scoped memory for tpu_custom_call.1']
    #allocation4 [shape = 's32[1]{0}', space=sflag, size = 0x4, scoped, tag = 'scoped memory for tpu_custom_call.1']
    #allocation5 [shape = 'u8[1024]{0}', space=vmem, size = 0x400, scoped, tag = 'input window, operand 1, single buffered']
    #allocation6 [shape = 's32[1]{0}', space=sflag, size = 0x4, scoped, tag = 'scoped memory for tpu_custom_call.1']
    #allocation7 [shape = 'u8[2048]{0}', space=vmem, size = 0x800, scoped, tag = 'output window, operand 0, single buffered']
    %7 = vsyncpa [#allocation3], 0
    %8 = vsyncpa [#allocation6], 0
    %9 = vsyncpa [#allocation4], 0
    // Predicated region
    $region2: #{tpu_custom_call.1} parent=1 // pred_check
      _
    $region3: #{tpu_custom_call.1} parent=1 // pred_check_branch
      %11 = sbr.rel (0) target = $region5
    $region4: #{tpu_custom_call.1} parent=1 // pred_region
      %s13 = ssub.s32 64, 64
      %14 = vsyncadd [#allocation3], %s13
      %s16 = sshll.u32 [#allocation2], 4
      %s17 = int_to_ptr.vmem [resolvable:$true] %s16
      %19 = dma.hbm_to_vmem [thread:$0]  %s0, 64, %s17, [#allocation3]
    $region5: #{tpu_custom_call.1} parent=1 // pred_fallthru
      _
    // Predicated region
    $region6: #{tpu_custom_call.1} parent=1 // pred_check
      _
    $region7: #{tpu_custom_call.1} parent=1 // pred_check_branch
      %21 = sbr.rel (0) target = $region9
    $region8: #{tpu_custom_call.1} parent=1 // pred_region
      %s23 = ssub.s32 32, 32
      %24 = vsyncadd [#allocation6], %s23
      %s26 = sshll.u32 [#allocation5], 4
      %s27 = int_to_ptr.vmem [resolvable:$true] %s26
      %29 = dma.hbm_to_vmem [thread:$0]  %s1, 32, %s27, [#allocation6]
    $region9: #{tpu_custom_call.1} parent=1 // pred_fallthru
      _
    // Predicated region
    $region10: #{tpu_custom_call.1} parent=1 // pred_check
      _
    $region11: #{tpu_custom_call.1} parent=1 // pred_check_branch
      %31 = sbr.rel (0) target = $region13
    $region12: #{tpu_custom_call.1} parent=1 // pred_region
      %32 = dma.done [#allocation3], 64
    $region13: #{tpu_custom_call.1} parent=1 // pred_fallthru
      _
    // Predicated region
    $region14: #{tpu_custom_call.1} parent=1 // pred_check
      _
    $region15: #{tpu_custom_call.1} parent=1 // pred_check_branch
      %34 = sbr.rel (0) target = $region17
    $region16: #{tpu_custom_call.1} parent=1 // pred_region
      %35 = dma.done [#allocation6], 32
    $region17: #{tpu_custom_call.1} parent=1 // pred_fallthru
      _
    %v36 = vld [vmem:[#allocation2] sm:$0xf]
    %v37 = vld [vmem:[#allocation5] sm:$0x3]
    %v39 = vlaneseq
    %v40 = vshrl.u32 %v39, 7
    %v41 = vsub.s32 0, %v40
    %v42 = vrot.slane %v37, %v41
    %v43 = vlaneseq
    %v44 = vshrl.u32 %v43, 7
    %v45 = vsub.s32 1, %v44
    %v46 = vrot.slane %v37, %v45
    %v47 = vcombine.low %v42, %v46
    %v49 = vunpack.c.l.s4 1983009808
    %v50 = vunpack.c.0.s8 %v49
    %v51 = vlaneseq
    %v52 = vshrl.u32 %v51, 7
    %v53 = vsub.s32 %v50, %v52
    %v54 = vrot.slane %v47, %v53
    %v56 = vadd.f32 %v36, %v54
    %57 = vst [vmem:[#allocation7] sm:$0xf] %v56
    // Predicated region
    $region18: #{tpu_custom_call.1} parent=1 // pred_check
      _
    $region19: #{tpu_custom_call.1} parent=1 // pred_check_branch
      %59 = sbr.rel (0) target = $region21
    $region20: #{tpu_custom_call.1} parent=1 // pred_region
      %s61 = ssub.s32 64, 64
      %62 = vsyncadd [#allocation4], %s61
      %s64 = sshll.u32 [#allocation7], 4
      %s65 = int_to_ptr.vmem [resolvable:$true] %s64
      %67 = dma.vmem_to_hbm [thread:$0]  %s65, 64, %s2, [#allocation4]
    $region21: #{tpu_custom_call.1} parent=1 // pred_fallthru
      _
    // Predicated region
    $region22: #{tpu_custom_call.1} parent=1 // pred_check
      _
    $region23: #{tpu_custom_call.1} parent=1 // pred_check_branch
      %69 = sbr.rel (0) target = $region25
    $region24: #{tpu_custom_call.1} parent=1 // pred_region
      %70 = dma.done [#allocation4], 64
    $region25: #{tpu_custom_call.1} parent=1 // pred_fallthru
      _
    %71 = vsyncpa [#allocation3], 1
    %72 = vsyncpa [#allocation6], 1
    %73 = vsyncpa [#allocation4], 1

</llo_original>
